<compile_context>
chip_gen: v7x
topology: tpu7x:2x2x1
jax: 0.10.0
libtpu: 0.0.40
codegen_flags: <defaults>
</compile_context>

<pallas_src>
import functools
import math

import jax
import jax.numpy as jnp
import numpy as np
from jax.experimental import pallas as pl
from jax.experimental.pallas import tpu as pltpu


_INV_SQRT2 = 1.0 / math.sqrt(2.0)


def _fourier_unit_kernel(n_freq, x_ref, wr_ref, wi_ref, b_ref,
                         cmat_ref, smat_ref, icmat_ref, ismat_ref, o_ref):
    """One batch-block. x_ref: (B_blk*C, L); o_ref: (B_blk*Cout, L)."""
    w_dtype = wr_ref.dtype            # matmul operand dtype (bf16 or f32)
    fp = cmat_ref.shape[1]            # padded frequency count (multiple of 128)

    # --- rfft(norm='ortho') along L as two real matmuls (f32 accumulation) ---
    x = x_ref[...]                                                        # (Rin, L)
    re = jnp.dot(x, cmat_ref[...], preferred_element_type=jnp.float32)    # (Rin, Fp)
    im = jnp.dot(x, smat_ref[...], preferred_element_type=jnp.float32)    # (Rin, Fp)

    # --- 1x1 Conv1d over channels: block-diagonal weight (one block per batch
    # element in this batch-block), rows ordered [real-out rows | imag-out rows].
    h = (jnp.dot(wr_ref[...], re.astype(w_dtype), preferred_element_type=jnp.float32)
         + jnp.dot(wi_ref[...], im.astype(w_dtype), preferred_element_type=jnp.float32)
         + b_ref[...])                                                    # (Rout2, Fp) f32

    # --- InstanceNorm1d (affine=False, eps=1e-5, biased variance) over the
    # first n_freq valid bins only — single-pass sum / sum-of-squares (f32).
    mask = jax.lax.broadcasted_iota(jnp.int32, (1, fp), 1) < n_freq
    hm = jnp.where(mask, h, 0.0)
    inv_f = 1.0 / float(n_freq)
    mean = jnp.sum(hm, axis=-1, keepdims=True) * inv_f
    var = jnp.maximum(jnp.sum(hm * hm, axis=-1, keepdims=True) * inv_f - mean * mean, 0.0)
    z = (h - mean) * jax.lax.rsqrt(var + 1e-5)

    # --- exact (erf) GELU, matching nn.GELU default.  Padded columns hold junk
    # but are multiplied by zero rows of icmat/ismat below, so they never land.
    g = 0.5 * z * (1.0 + jax.lax.erf(z * _INV_SQRT2))

    # --- chunk(real, imag) is a static sublane slice thanks to the row order,
    # then irfft(norm='ortho') as two real matmuls.
    rout = g.shape[0] // 2
    g_re = g[:rout].astype(w_dtype)                                       # (Rout, Fp)
    g_im = g[rout:].astype(w_dtype)                                       # (Rout, Fp)
    out = (jnp.dot(g_re, icmat_ref[...], preferred_element_type=jnp.float32)
           + jnp.dot(g_im, ismat_ref[...], preferred_element_type=jnp.float32))  # (Rout, L)

    # NOTE: with L < 128 this store is lane-masked; for real workloads L >= 128
    # the (rows, L) slab is lane-dense (unmasked vst).
    o_ref[...] = out.astype(o_ref.dtype)


@functools.lru_cache(maxsize=None)
def _dft_matrices(length, padded_freq, dtype):
    """Ortho rfft/irfft matrices with the frequency axis zero-padded to padded_freq."""
    L = length
    F = L // 2 + 1
    n = np.arange(L, dtype=np.float64)[:, None]
    k = np.arange(padded_freq, dtype=np.float64)[None, :]
    ang = 2.0 * np.pi * n * k / L                                # (L, Fp)
    scale = 1.0 / math.sqrt(L)
    valid = (np.arange(padded_freq) < F)[None, :]                # zero padded bins
    cmat = np.where(valid, np.cos(ang) * scale, 0.0)             # (L, Fp): real part
    smat = np.where(valid, -np.sin(ang) * scale, 0.0)            # (L, Fp): imag part
    # Inverse (Hermitian fold): weight 1 for DC and Nyquist bins, 2 otherwise;
    # imag of DC/Nyquist is ignored automatically (sin terms vanish there).
    kk = np.arange(padded_freq)
    wk = np.where((kk == 0) | (kk == L // 2), 1.0, 2.0)[:, None]
    icmat = np.where(valid.T, np.cos(ang.T) * scale * wk, 0.0)   # (Fp, L)
    ismat = np.where(valid.T, -np.sin(ang.T) * scale * wk, 0.0)  # (Fp, L)
    return tuple(jnp.asarray(m, dtype=dtype) for m in (cmat, smat, icmat, ismat))


def _pick_batch_block(batch, channels):
    """Largest divisor of `batch` whose folded rows (B_blk*C) fit one MXU M tile.
    (On v7x one may instead cap B_blk at batch//2 so both TensorCores get work.)"""
    cap = max(1, 128 // max(1, channels))
    for cand in range(min(batch, cap), 0, -1):
        if batch % cand == 0:
            return cand
    return 1


def fourier_unit(x, weight, bias, *, compute_dtype=jnp.bfloat16):
    """FourierUnit forward.  x: (B, C, L) f32; weight: (2*Cout, 2*C, 1); bias: (2*Cout,)."""
    B, C, L = x.shape
    assert L % 2 == 0, "irfft default output length assumes even L"
    Cout2 = weight.shape[0]
    assert Cout2 % 2 == 0
    Cout = Cout2 // 2
    F = L // 2 + 1
    Fp = ((F + 127) // 128) * 128        # lane-dense / MXU-aligned frequency axis

    B_blk = _pick_batch_block(B, C)
    G = B // B_blk                       # grid steps (batch blocks)
    Rin = B_blk * C                      # rows of the rfft matmuls
    Rout = B_blk * Cout                  # rows of the irfft matmuls / output block
    Rout2 = 2 * Rout

    cmat, smat, icmat, ismat = _dft_matrices(L, Fp, compute_dtype)

    # 1x1 conv == channel matmul.  Build the per-batch block-diagonal weight with
    # rows ordered [real-output rows (b-major, ch-minor) | imag-output rows].
    w2d = weight[:, :, 0].astype(jnp.float32)             # (2*Cout, 2*C)
    wr3 = w2d[:, :C].reshape(2, Cout, C)                  # acts on real half
    wi3 = w2d[:, C:].reshape(2, Cout, C)                  # acts on imag half
    eye_b = jnp.eye(B_blk, dtype=jnp.float32)
    wr_blk = jnp.einsum("poc,bB->pboBc", wr3, eye_b).reshape(Rout2, Rin).astype(compute_dtype)
    wi_blk = jnp.einsum("poc,bB->pboBc", wi3, eye_b).reshape(Rout2, Rin).astype(compute_dtype)
    b_blk = jnp.broadcast_to(bias.reshape(2, 1, Cout).astype(jnp.float32),
                             (2, B_blk, Cout)).reshape(Rout2, 1)

    # Fold the batch block into the row dimension wrapper-side (free reshape).
    x2 = x.reshape(G, Rin, L).astype(compute_dtype)

    kernel = functools.partial(_fourier_unit_kernel, F)

    out = pl.pallas_call(
        kernel,
        out_shape=jax.ShapeDtypeStruct((G, Rout, L), jnp.float32),
        grid_spec=pltpu.PrefetchScalarGridSpec(
            num_scalar_prefetch=0,
            grid=(G,),
            in_specs=[
                pl.BlockSpec((pl.Squeezed(), Rin, L), lambda g: (g, 0, 0)),
                pl.BlockSpec((Rout2, Rin), lambda g: (0, 0)),
                pl.BlockSpec((Rout2, Rin), lambda g: (0, 0)),
                pl.BlockSpec((Rout2, 1), lambda g: (0, 0)),
                pl.BlockSpec((L, Fp), lambda g: (0, 0)),
                pl.BlockSpec((L, Fp), lambda g: (0, 0)),
                pl.BlockSpec((Fp, L), lambda g: (0, 0)),
                pl.BlockSpec((Fp, L), lambda g: (0, 0)),
            ],
            out_specs=pl.BlockSpec((pl.Squeezed(), Rout, L), lambda g: (g, 0, 0)),
        ),
        # NOTE: for very large L the four (L,Fp)/(Fp,L) DFT matrices dominate VMEM;
        # on v7x (64 MiB) raise vmem_limit_bytes here, single-buffer the grid-
        # invariant operands, or tile Fp along an inner 'arbitrary' grid axis.
        compiler_params=pltpu.CompilerParams(dimension_semantics=("parallel",)),
    )(x2, wr_blk, wi_blk, b_blk, cmat, smat, icmat, ismat)

    return out.reshape(B, Cout, L)


def reference_fourier_unit(x, weight, bias):
    """Pure-JAX f32 reference mirroring the PyTorch forward."""
    xf = jnp.fft.rfft(x, norm="ortho")
    y = jnp.concatenate([xf.real, xf.imag], axis=1)
    w = weight[:, :, 0]
    h = jnp.einsum("oc,bcf->bof", w, y) + bias[None, :, None]
    mean = h.mean(axis=-1, keepdims=True)
    var = ((h - mean) ** 2).mean(axis=-1, keepdims=True)
    z = (h - mean) / jnp.sqrt(var + 1e-5)
    g = 0.5 * z * (1.0 + jax.scipy.special.erf(z / jnp.sqrt(2.0)))
    cout = g.shape[1] // 2
    xc = g[:, :cout, :] + 1j * g[:, cout:, :]
    return jnp.fft.irfft(xc, norm="ortho")


if __name__ == "__main__":
    # FourierUnit(in_channels=4, out_channels=4, kernel_size=3)  (kernel_size unused)
    B, C_in, C_out, L = 2, 4, 4, 16

    key = jax.random.PRNGKey(0)
    kx, kw, kb = jax.random.split(key, 3)

    x = jax.random.normal(kx, (B, C_in, L), dtype=jnp.float32)

    # Deterministic Conv1d(2*C_in -> 2*C_out, k=1) params (PyTorch-style uniform bound).
    fan_in = 2 * C_in * 1
    bound = 1.0 / math.sqrt(fan_in)
    weight = jax.random.uniform(kw, (2 * C_out, 2 * C_in, 1),
                                minval=-bound, maxval=bound, dtype=jnp.float32)
    bias = jax.random.uniform(kb, (2 * C_out,),
                              minval=-bound, maxval=bound, dtype=jnp.float32)

    ref = jax.block_until_ready(reference_fourier_unit(x, weight, bias))

    # Strict semantic check: f32 compute path must match the reference tightly.
    out_f32 = jax.block_until_ready(
        fourier_unit(x, weight, bias, compute_dtype=jnp.float32))
    np.testing.assert_allclose(np.asarray(out_f32), np.asarray(ref),
                               rtol=1e-4, atol=1e-4)

    # Default performance path: bf16 MXU operands with f32 accumulation.  Looser
    # tolerance reflects bf16 rounding of the DFT / conv operands only (the
    # norm / GELU math stays f32).
    out_bf16 = jax.block_until_ready(fourier_unit(x, weight, bias))
    np.testing.assert_allclose(np.asarray(out_bf16), np.asarray(ref),
                               rtol=1e-1, atol=1e-1)

    print("KERNEL_OK")
</pallas_src>

<mosaic_0001>
module attributes {stable_mosaic.version = 11 : i64} {
  func.func @_fourier_unit_kernel(%arg0: i32, %arg1: memref<1x8x16xf32, #tpu.memory_space<vmem>>, %arg2: memref<16x8xf32, #tpu.memory_space<vmem>>, %arg3: memref<16x8xf32, #tpu.memory_space<vmem>>, %arg4: memref<16x1xf32, #tpu.memory_space<vmem>>, %arg5: memref<16x128xf32, #tpu.memory_space<vmem>>, %arg6: memref<16x128xf32, #tpu.memory_space<vmem>>, %arg7: memref<128x16xf32, #tpu.memory_space<vmem>>, %arg8: memref<128x16xf32, #tpu.memory_space<vmem>>, %arg9: memref<1x8x16xf32, #tpu.memory_space<vmem>>) attributes {dimension_semantics = [#tpu.dimension_semantics<parallel>], iteration_bounds = array<i64: 1>, scalar_prefetch = 0 : i64, scratch_operands = 0 : i64, tpu.core_type = #tpu.core_type<tc>, window_params = [{transform_indices = @transform_0, window_bounds = array<i64: 1, 8, 16>}, {pipeline_mode = #tpu.pipeline_mode<synchronous>, transform_indices = @transform_1, window_bounds = array<i64: 16, 8>}, {pipeline_mode = #tpu.pipeline_mode<synchronous>, transform_indices = @transform_2, window_bounds = array<i64: 16, 8>}, {pipeline_mode = #tpu.pipeline_mode<synchronous>, transform_indices = @transform_3, window_bounds = array<i64: 16, 1>}, {pipeline_mode = #tpu.pipeline_mode<synchronous>, transform_indices = @transform_4, window_bounds = array<i64: 16, 128>}, {pipeline_mode = #tpu.pipeline_mode<synchronous>, transform_indices = @transform_5, window_bounds = array<i64: 16, 128>}, {pipeline_mode = #tpu.pipeline_mode<synchronous>, transform_indices = @transform_6, window_bounds = array<i64: 128, 16>}, {pipeline_mode = #tpu.pipeline_mode<synchronous>, transform_indices = @transform_7, window_bounds = array<i64: 128, 16>}, {transform_indices = @transform_8, window_bounds = array<i64: 1, 8, 16>}]} {
    %c0 = arith.constant 0 : index
    %c0_0 = arith.constant 0 : index
    %c0_1 = arith.constant 0 : index
    %0 = vector.load %arg1[%c0, %c0_0, %c0_1] : memref<1x8x16xf32, #tpu.memory_space<vmem>>, vector<1x8x16xf32>
    %1 = vector.shape_cast %0 : vector<1x8x16xf32> to vector<8x16xf32>
    %c0_2 = arith.constant 0 : index
    %c0_3 = arith.constant 0 : index
    %2 = vector.load %arg5[%c0_2, %c0_3] : memref<16x128xf32, #tpu.memory_space<vmem>>, vector<16x128xf32>
    %cst = arith.constant dense<0.000000e+00> : vector<8x128xf32>
    %3 = tpu.matmul %1, %2, %cst {dimension_numbers = #tpu.dot_dimension_numbers<[1], [0], [0], [1], [0, 0, 1, 1], [], []>} : vector<8x16xf32>, vector<16x128xf32>, vector<8x128xf32> -> vector<8x128xf32>
    %c0_4 = arith.constant 0 : index
    %c0_5 = arith.constant 0 : index
    %4 = vector.load %arg6[%c0_4, %c0_5] : memref<16x128xf32, #tpu.memory_space<vmem>>, vector<16x128xf32>
    %cst_6 = arith.constant dense<0.000000e+00> : vector<8x128xf32>
    %5 = tpu.matmul %1, %4, %cst_6 {dimension_numbers = #tpu.dot_dimension_numbers<[1], [0], [0], [1], [0, 0, 1, 1], [], []>} : vector<8x16xf32>, vector<16x128xf32>, vector<8x128xf32> -> vector<8x128xf32>
    %c0_7 = arith.constant 0 : index
    %c0_8 = arith.constant 0 : index
    %6 = vector.load %arg2[%c0_7, %c0_8] : memref<16x8xf32, #tpu.memory_space<vmem>>, vector<16x8xf32>
    %cst_9 = arith.constant dense<0.000000e+00> : vector<16x128xf32>
    %7 = tpu.matmul %6, %3, %cst_9 {dimension_numbers = #tpu.dot_dimension_numbers<[1], [0], [0], [1], [0, 0, 1, 1], [], []>} : vector<16x8xf32>, vector<8x128xf32>, vector<16x128xf32> -> vector<16x128xf32>
    %c0_10 = arith.constant 0 : index
    %c0_11 = arith.constant 0 : index
    %8 = vector.load %arg3[%c0_10, %c0_11] : memref<16x8xf32, #tpu.memory_space<vmem>>, vector<16x8xf32>
    %cst_12 = arith.constant dense<0.000000e+00> : vector<16x128xf32>
    %9 = tpu.matmul %8, %5, %cst_12 {dimension_numbers = #tpu.dot_dimension_numbers<[1], [0], [0], [1], [0, 0, 1, 1], [], []>} : vector<16x8xf32>, vector<8x128xf32>, vector<16x128xf32> -> vector<16x128xf32>
    %10 = arith.addf %7, %9 : vector<16x128xf32>
    %c0_13 = arith.constant 0 : index
    %c0_14 = arith.constant 0 : index
    %11 = vector.load %arg4[%c0_13, %c0_14] : memref<16x1xf32, #tpu.memory_space<vmem>>, vector<16x1xf32>
    %12 = vector.broadcast %11 : vector<16x1xf32> to vector<16x128xf32>
    %13 = arith.addf %10, %12 : vector<16x128xf32>
    %14 = tpu.iota {dimensions = array<i32: 1>} : vector<1x128xi32>
    %c9_i32 = arith.constant 9 : i32
    %15 = vector.broadcast %c9_i32 : i32 to vector<1x128xi32>
    %16 = arith.cmpi slt, %14, %15 : vector<1x128xi32>
    %cst_15 = arith.constant 0.000000e+00 : f32
    %17 = vector.shape_cast %16 : vector<1x128xi1> to vector<1x128xi1>
    %18 = vector.broadcast %17 : vector<1x128xi1> to vector<16x128xi1>
    %19 = vector.broadcast %cst_15 : f32 to vector<16x128xf32>
    %20 = arith.select %18, %13, %19 : vector<16x128xi1>, vector<16x128xf32>
    %cst_16 = arith.constant dense<0.000000e+00> : vector<16xf32>
    %21 = vector.multi_reduction <add>, %20, %cst_16 [1] : vector<16x128xf32> to vector<16xf32>
    %22 = vector.shape_cast %21 : vector<16xf32> to vector<16x1xf32>
    %cst_17 = arith.constant 0.111111112 : f32
    %23 = vector.broadcast %cst_17 : f32 to vector<16x1xf32>
    %24 = arith.mulf %22, %23 : vector<16x1xf32>
    %25 = arith.mulf %20, %20 : vector<16x128xf32>
    %cst_18 = arith.constant dense<0.000000e+00> : vector<16xf32>
    %26 = vector.multi_reduction <add>, %25, %cst_18 [1] : vector<16x128xf32> to vector<16xf32>
    %27 = vector.shape_cast %26 : vector<16xf32> to vector<16x1xf32>
    %cst_19 = arith.constant 0.111111112 : f32
    %28 = vector.broadcast %cst_19 : f32 to vector<16x1xf32>
    %29 = arith.mulf %27, %28 : vector<16x1xf32>
    %30 = arith.mulf %24, %24 : vector<16x1xf32>
    %31 = arith.subf %29, %30 : vector<16x1xf32>
    %cst_20 = arith.constant 0.000000e+00 : f32
    %32 = vector.broadcast %cst_20 : f32 to vector<16x1xf32>
    %33 = arith.maximumf %31, %32 : vector<16x1xf32>
    %34 = vector.broadcast %24 : vector<16x1xf32> to vector<16x128xf32>
    %35 = arith.subf %13, %34 : vector<16x128xf32>
    %cst_21 = arith.constant 9.99999974E-6 : f32
    %36 = vector.broadcast %cst_21 : f32 to vector<16x1xf32>
    %37 = arith.addf %33, %36 : vector<16x1xf32>
    %38 = math.rsqrt %37 : vector<16x1xf32>
    %39 = vector.broadcast %38 : vector<16x1xf32> to vector<16x128xf32>
    %40 = arith.mulf %35, %39 : vector<16x128xf32>
    %cst_22 = arith.constant 5.000000e-01 : f32
    %41 = vector.broadcast %cst_22 : f32 to vector<16x128xf32>
    %42 = arith.mulf %41, %40 : vector<16x128xf32>
    %cst_23 = arith.constant 0.707106769 : f32
    %43 = vector.broadcast %cst_23 : f32 to vector<16x128xf32>
    %44 = arith.mulf %40, %43 : vector<16x128xf32>
    %45 = math.erf %44 : vector<16x128xf32>
    %cst_24 = arith.constant 1.000000e+00 : f32
    %46 = vector.broadcast %cst_24 : f32 to vector<16x128xf32>
    %47 = arith.addf %46, %45 : vector<16x128xf32>
    %48 = arith.mulf %42, %47 : vector<16x128xf32>
    %49 = vector.extract_strided_slice %48 {offsets = [0, 0], sizes = [8, 128], strides = [1, 1]} : vector<16x128xf32> to vector<8x128xf32>
    %50 = vector.extract_strided_slice %48 {offsets = [8, 0], sizes = [8, 128], strides = [1, 1]} : vector<16x128xf32> to vector<8x128xf32>
    %c0_25 = arith.constant 0 : index
    %c0_26 = arith.constant 0 : index
    %51 = vector.load %arg7[%c0_25, %c0_26] : memref<128x16xf32, #tpu.memory_space<vmem>>, vector<128x16xf32>
    %cst_27 = arith.constant dense<0.000000e+00> : vector<8x16xf32>
    %52 = tpu.matmul %49, %51, %cst_27 {dimension_numbers = #tpu.dot_dimension_numbers<[1], [0], [0], [1], [0, 0, 1, 1], [], []>} : vector<8x128xf32>, vector<128x16xf32>, vector<8x16xf32> -> vector<8x16xf32>
    %c0_28 = arith.constant 0 : index
    %c0_29 = arith.constant 0 : index
    %53 = vector.load %arg8[%c0_28, %c0_29] : memref<128x16xf32, #tpu.memory_space<vmem>>, vector<128x16xf32>
    %cst_30 = arith.constant dense<0.000000e+00> : vector<8x16xf32>
    %54 = tpu.matmul %50, %53, %cst_30 {dimension_numbers = #tpu.dot_dimension_numbers<[1], [0], [0], [1], [0, 0, 1, 1], [], []>} : vector<8x128xf32>, vector<128x16xf32>, vector<8x16xf32> -> vector<8x16xf32>
    %55 = arith.addf %52, %54 : vector<8x16xf32>
    %c0_31 = arith.constant 0 : index
    %c0_32 = arith.constant 0 : index
    %c0_33 = arith.constant 0 : index
    %56 = vector.load %arg9[%c0_31, %c0_32, %c0_33] : memref<1x8x16xf32, #tpu.memory_space<vmem>>, vector<1x8x16xf32>
    %57 = vector.shape_cast %56 : vector<1x8x16xf32> to vector<8x16xf32>
    %58 = vector.shape_cast %55 : vector<8x16xf32> to vector<1x8x16xf32>
    tpu.vector_store %arg9[%c0_31, %c0_32, %c0_33], %58 {strides = array<i32>} : memref<1x8x16xf32, #tpu.memory_space<vmem>>, vector<1x8x16xf32>,
    return
  }
  func.func @transform_0(%arg0: i32) -> (i32, i32, i32) {
    %c0_i32 = arith.constant 0 : i32
    %c0_i32_0 = arith.constant 0 : i32
    %c0_i32_1 = arith.constant 0 : i32
    return %arg0, %c0_i32, %c0_i32_0 : i32, i32, i32
  }
  func.func @transform_1(%arg0: i32) -> (i32, i32) {
    %c0_i32 = arith.constant 0 : i32
    %c0_i32_0 = arith.constant 0 : i32
    %c0_i32_1 = arith.constant 0 : i32
    return %c0_i32, %c0_i32_0 : i32, i32
  }
  func.func @transform_2(%arg0: i32) -> (i32, i32) {
    %c0_i32 = arith.constant 0 : i32
    %c0_i32_0 = arith.constant 0 : i32
    %c0_i32_1 = arith.constant 0 : i32
    return %c0_i32, %c0_i32_0 : i32, i32
  }
  func.func @transform_3(%arg0: i32) -> (i32, i32) {
    %c0_i32 = arith.constant 0 : i32
    %c0_i32_0 = arith.constant 0 : i32
    %c0_i32_1 = arith.constant 0 : i32
    return %c0_i32, %c0_i32_0 : i32, i32
  }
  func.func @transform_4(%arg0: i32) -> (i32, i32) {
    %c0_i32 = arith.constant 0 : i32
    %c0_i32_0 = arith.constant 0 : i32
    %c0_i32_1 = arith.constant 0 : i32
    return %c0_i32, %c0_i32_0 : i32, i32
  }
  func.func @transform_5(%arg0: i32) -> (i32, i32) {
    %c0_i32 = arith.constant 0 : i32
    %c0_i32_0 = arith.constant 0 : i32
    %c0_i32_1 = arith.constant 0 : i32
    return %c0_i32, %c0_i32_0 : i32, i32
  }
  func.func @transform_6(%arg0: i32) -> (i32, i32) {
    %c0_i32 = arith.constant 0 : i32
    %c0_i32_0 = arith.constant 0 : i32
    %c0_i32_1 = arith.constant 0 : i32
    return %c0_i32, %c0_i32_0 : i32, i32
  }
  func.func @transform_7(%arg0: i32) -> (i32, i32) {
    %c0_i32 = arith.constant 0 : i32
    %c0_i32_0 = arith.constant 0 : i32
    %c0_i32_1 = arith.constant 0 : i32
    return %c0_i32, %c0_i32_0 : i32, i32
  }
  func.func @transform_8(%arg0: i32) -> (i32, i32, i32) {
    %c0_i32 = arith.constant 0 : i32
    %c0_i32_0 = arith.constant 0 : i32
    %c0_i32_1 = arith.constant 0 : i32
    return %arg0, %c0_i32, %c0_i32_0 : i32, i32, i32
  }
}

</mosaic_0001>

<llo_original>
// kernel: tpu_custom_call.1
$region0: #{tpu_custom_call.1}
  #allocation0 [shape = 'u32[]', space=smem, size = 0x4, offset = 0x4, fixed_abs, tag = 'smem constant byte address 0x4 - core index']
  #allocation1 [shape = 'u32[144,128]{1,0:T(1,128)}', space=vmem, size = 0x12000, scoped, tag = 'internal scratch']
  %s0 = inlined_call_operand.vmem [shape: f32[1,8,16], index: 0, kind: input, shape index: {}]
  %s1 = inlined_call_operand.vmem [shape: f32[16,8], index: 1, kind: input, shape index: {}]
  %s2 = inlined_call_operand.vmem [shape: f32[16,8], index: 2, kind: input, shape index: {}]
  %s3 = inlined_call_operand.vmem [shape: f32[16,1], index: 3, kind: input, shape index: {}]
  %s4 = inlined_call_operand.vmem [shape: f32[16,128], index: 4, kind: input, shape index: {}]
  %s5 = inlined_call_operand.vmem [shape: f32[16,128], index: 5, kind: input, shape index: {}]
  %s6 = inlined_call_operand.vmem [shape: f32[128,16], index: 6, kind: input, shape index: {}]
  %s7 = inlined_call_operand.vmem [shape: f32[128,16], index: 7, kind: input, shape index: {}]
  %s8 = inlined_call_operand.hbm [shape: f32[1,8,16], index: 8, kind: output, shape index: {}]
  %s9 = sld [smem:[#allocation0]]
  $region42: #{tpu_custom_call.1} parent=0
    _
  %s11 = ssub.s32 1, %s9
  %s12 = scalar_select 0, %s11, %s9
  $region1: #{tpu_custom_call.1} parent=0
    #allocation2 [shape = 'u8[4096]{0}', space=vmem, size = 0x1000, scoped, tag = 'output window, operand 0, single buffered']
    #allocation3 [shape = 's32[1]{0}', space=sflag, size = 0x4, scoped, tag = 'scoped memory for tpu_custom_call.1']
    %13 = vsyncpa [#allocation3], 0
    // Predicated region
    $region2: #{tpu_custom_call.1} parent=1 // pred_check
      _
    $region3: #{tpu_custom_call.1} parent=1 // pred_check_branch
      %15 = sbr.rel (0) target = $region5
    $region4: #{tpu_custom_call.1} parent=1 // pred_region
      _
    $region5: #{tpu_custom_call.1} parent=1 // pred_fallthru
      _
    // Predicated region
    $region6: #{tpu_custom_call.1} parent=1 // pred_check
      _
    $region7: #{tpu_custom_call.1} parent=1 // pred_check_branch
      %17 = sbr.rel (0) target = $region9
    $region8: #{tpu_custom_call.1} parent=1 // pred_region
      _
    $region9: #{tpu_custom_call.1} parent=1 // pred_fallthru
      _
    // Predicated region
    $region10: #{tpu_custom_call.1} parent=1 // pred_check
      _
    $region11: #{tpu_custom_call.1} parent=1 // pred_check_branch
      %19 = sbr.rel (0) target = $region13
    $region12: #{tpu_custom_call.1} parent=1 // pred_region
      _
    $region13: #{tpu_custom_call.1} parent=1 // pred_fallthru
      _
    // Predicated region
    $region14: #{tpu_custom_call.1} parent=1 // pred_check
      _
    $region15: #{tpu_custom_call.1} parent=1 // pred_check_branch
      %21 = sbr.rel (0) target = $region17
    $region16: #{tpu_custom_call.1} parent=1 // pred_region
      _
    $region17: #{tpu_custom_call.1} parent=1 // pred_fallthru
      _
    // Predicated region
    $region18: #{tpu_custom_call.1} parent=1 // pred_check
      _
    $region19: #{tpu_custom_call.1} parent=1 // pred_check_branch
      %23 = sbr.rel (0) target = $region21
    $region20: #{tpu_custom_call.1} parent=1 // pred_region
      _
    $region21: #{tpu_custom_call.1} parent=1 // pred_fallthru
      _
    // Predicated region
    $region22: #{tpu_custom_call.1} parent=1 // pred_check
      _
    $region23: #{tpu_custom_call.1} parent=1 // pred_check_branch
      %25 = sbr.rel (0) target = $region25
    $region24: #{tpu_custom_call.1} parent=1 // pred_region
      _
    $region25: #{tpu_custom_call.1} parent=1 // pred_fallthru
      _
    // Predicated region
    $region26: #{tpu_custom_call.1} parent=1 // pred_check
      _
    $region27: #{tpu_custom_call.1} parent=1 // pred_check_branch
      %27 = sbr.rel (0) target = $region29
    $region28: #{tpu_custom_call.1} parent=1 // pred_region
      _
    $region29: #{tpu_custom_call.1} parent=1 // pred_fallthru
      _
    // Predicated region
    $region30: #{tpu_custom_call.1} parent=1 // pred_check
      _
    $region31: #{tpu_custom_call.1} parent=1 // pred_check_branch
      %29 = sbr.rel (0) target = $region33
    $region32: #{tpu_custom_call.1} parent=1 // pred_region
      _
    $region33: #{tpu_custom_call.1} parent=1 // pred_fallthru
      _
    %v30 = vld [vmem:[%s0] sm:$0xff]
    %v31 = vld [vmem:[%s4] sm:$0xff]
    %v32 = vld [vmem:[%s4 + $0x8] sm:$0xff]
    %vm33 = vcmask 130048
    %v35 = vsel %vm33, %v30, 0
    %37 = vmatprep.subr.mxu0 0.0
    %38 = vmatpush1.msra.mxu0 %v31
    %39 = vmatprep.subr.mxu0 0.0
    %40 = vmatpush1.msra.mxu0 %v32
    %41 = vmatprep.subr.mxu0 0.0
    %42 = vmatpush1.msra.mxu0 0.0
    %43 = vmatprep.subr.mxu0 0.0
    %44 = vmatpush1.msra.mxu0 0.0
    %45 = vmatprep.subr.mxu0 0.0
    %46 = vmatpush1.msra.mxu0 0.0
    %47 = vmatprep.subr.mxu0 0.0
    %48 = vmatpush1.msra.mxu0 0.0
    %49 = vmatprep.subr.mxu0 0.0
    %50 = vmatpush1.msra.mxu0 0.0
    %51 = vmatprep.subr.mxu0 0.0
    %52 = vmatpush1.msra.mxu0 0.0
    %53 = vmatprep.subr.mxu0 0.0
    %54 = vmatpush1.msra.mxu0 0.0
    %55 = vmatprep.subr.mxu0 0.0
    %56 = vmatpush1.msra.mxu0 0.0
    %57 = vmatprep.subr.mxu0 0.0
    %58 = vmatpush1.msra.mxu0 0.0
    %59 = vmatprep.subr.mxu0 0.0
    %60 = vmatpush1.msra.mxu0 0.0
    %61 = vmatprep.subr.mxu0 0.0
    %62 = vmatpush1.msra.mxu0 0.0
    %63 = vmatprep.subr.mxu0 0.0
    %64 = vmatpush1.msra.mxu0 0.0
    %65 = vmatprep.subr.mxu0 0.0
    %66 = vmatpush1.msra.mxu0 0.0
    %67 = vmatprep.subr.mxu0 0.0
    %68 = vmatpush1.msra.mxu0 0.0
    %69 = vmatprep.subr.mxu0 0.0
    %70 = vmatpush1.msra.mxu0 0.0
    %71 = vmatprep.subr.mxu0 0.0
    %72 = vmatpush1.msra.mxu0 0.0
    %73 = vmatprep.subr.mxu0 0.0
    %74 = vmatpush1.msra.mxu0 0.0
    %75 = vmatprep.subr.mxu0 0.0
    %76 = vmatpush1.msra.mxu0 0.0
    %77 = vmatprep.subr.mxu0 0.0
    %78 = vmatpush1.msra.mxu0 0.0
    %79 = vmatprep.subr.mxu0 0.0
    %80 = vmatpush1.msra.mxu0 0.0
    %81 = vmatprep.subr.mxu0 0.0
    %82 = vmatpush1.msra.mxu0 0.0
    %83 = vmatprep.subr.mxu0 0.0
    %84 = vmatpush1.msra.mxu0 0.0
    %85 = vmatprep.subr.mxu0 0.0
    %86 = vmatpush1.msra.mxu0 0.0
    %87 = vmatprep.subr.mxu0 0.0
    %88 = vmatpush1.msra.mxu0 0.0
    %89 = vmatprep.subr.mxu0 0.0
    %90 = vmatpush1.msra.mxu0 0.0
    %91 = vmatprep.subr.mxu0 0.0
    %92 = vmatpush1.msra.mxu0 0.0
    %93 = vmatprep.subr.mxu0 0.0
    %94 = vmatpush1.msra.mxu0 0.0
    %95 = vmatprep.subr.mxu0 0.0
    %96 = vmatpush1.msra.mxu0 0.0
    %97 = vmatprep.subr.mxu0 0.0
    %98 = vmatpush1.msra.mxu0 0.0
    %99 = vmatprep.subr.mxu0 0.0
    %100 = vmatpush1.msra.mxu0 0.0
    %101 = vmatprep.mubr.f32.mxu0 0.0
    %102 = vmatmul.mubr.f32.gmra.mrb[0].mxu0 %v35
    %v103 = vpop.f32.mrb[0].mxu0
    %v104 = vadd.f32 0.0, %v103
    %v105 = vpop.f32.mrb[0].mxu0
    %106 = vdwg.mxu0
    %v107 = vld [vmem:[%s5] sm:$0xff]
    %v108 = vld [vmem:[%s5 + $0x8] sm:$0xff]
    %109 = vmatprep.subr.mxu0 0.0
    %110 = vmatpush1.msra.mxu0 %v107
    %111 = vmatprep.subr.mxu0 0.0
    %112 = vmatpush1.msra.mxu0 %v108
    %113 = vmatprep.subr.mxu0 0.0
    %114 = vmatpush1.msra.mxu0 0.0
    %115 = vmatprep.subr.mxu0 0.0
    %116 = vmatpush1.msra.mxu0 0.0
    %117 = vmatprep.subr.mxu0 0.0
    %118 = vmatpush1.msra.mxu0 0.0
    %119 = vmatprep.subr.mxu0 0.0
    %120 = vmatpush1.msra.mxu0 0.0
    %121 = vmatprep.subr.mxu0 0.0
    %122 = vmatpush1.msra.mxu0 0.0
    %123 = vmatprep.subr.mxu0 0.0
    %124 = vmatpush1.msra.mxu0 0.0
    %125 = vmatprep.subr.mxu0 0.0
    %126 = vmatpush1.msra.mxu0 0.0
    %127 = vmatprep.subr.mxu0 0.0
    %128 = vmatpush1.msra.mxu0 0.0
    %129 = vmatprep.subr.mxu0 0.0
    %130 = vmatpush1.msra.mxu0 0.0
    %131 = vmatprep.subr.mxu0 0.0
    %132 = vmatpush1.msra.mxu0 0.0
    %133 = vmatprep.subr.mxu0 0.0
    %134 = vmatpush1.msra.mxu0 0.0
    %135 = vmatprep.subr.mxu0 0.0
    %136 = vmatpush1.msra.mxu0 0.0
    %137 = vmatprep.subr.mxu0 0.0
    %138 = vmatpush1.msra.mxu0 0.0
    %139 = vmatprep.subr.mxu0 0.0
    %140 = vmatpush1.msra.mxu0 0.0
    %141 = vmatprep.subr.mxu0 0.0
    %142 = vmatpush1.msra.mxu0 0.0
    %143 = vmatprep.subr.mxu0 0.0
    %144 = vmatpush1.msra.mxu0 0.0
    %145 = vmatprep.subr.mxu0 0.0
    %146 = vmatpush1.msra.mxu0 0.0
    %147 = vmatprep.subr.mxu0 0.0
    %148 = vmatpush1.msra.mxu0 0.0
    %149 = vmatprep.subr.mxu0 0.0
    %150 = vmatpush1.msra.mxu0 0.0
    %151 = vmatprep.subr.mxu0 0.0
    %152 = vmatpush1.msra.mxu0 0.0
    %153 = vmatprep.subr.mxu0 0.0
    %154 = vmatpush1.msra.mxu0 0.0
    %155 = vmatprep.subr.mxu0 0.0
    %156 = vmatpush1.msra.mxu0 0.0
    %157 = vmatprep.subr.mxu0 0.0
    %158 = vmatpush1.msra.mxu0 0.0
    %159 = vmatprep.subr.mxu0 0.0
    %160 = vmatpush1.msra.mxu0 0.0
    %161 = vmatprep.subr.mxu0 0.0
    %162 = vmatpush1.msra.mxu0 0.0
    %163 = vmatprep.subr.mxu0 0.0
    %164 = vmatpush1.msra.mxu0 0.0
    %165 = vmatprep.subr.mxu0 0.0
    %166 = vmatpush1.msra.mxu0 0.0
    %167 = vmatprep.subr.mxu0 0.0
    %168 = vmatpush1.msra.mxu0 0.0
    %169 = vmatprep.subr.mxu0 0.0
    %170 = vmatpush1.msra.mxu0 0.0
    %171 = vmatprep.subr.mxu0 0.0
    %172 = vmatpush1.msra.mxu0 0.0
    %173 = vmatprep.mubr.f32.mxu0 0.0
    %174 = vmatmul.mubr.f32.gmra.mrb[0].mxu0 %v35
    %v175 = vpop.f32.mrb[0].mxu0
    %v176 = vadd.f32 0.0, %v175
    %v177 = vpop.f32.mrb[0].mxu0
    %178 = vdwg.mxu0
    %v179 = vld [vmem:[%s1] sm:$0xff]
    %v180 = vld [vmem:[%s1 + $0x8] sm:$0xff]
    %v181 = vld [vmem:[%s2] sm:$0xff]
    %v182 = vld [vmem:[%s2 + $0x8] sm:$0xff]
    %vm183 = vcmask 64512
    %v185 = vsel %vm183, %v181, 0
    %v188 = vsel %vm183, %v182, 0
    %190 = vmatprep.subr.mxu0 0.0
    %191 = vmatpush1.msra.mxu0 %v176
    %192 = vmatprep.subr.mxu0 0.0
    %193 = vmatpush1.msra.mxu0 0.0
    %194 = vmatprep.subr.mxu0 0.0
    %195 = vmatpush1.msra.mxu0 0.0
    %196 = vmatprep.subr.mxu0 0.0
    %197 = vmatpush1.msra.mxu0 0.0
    %198 = vmatprep.subr.mxu0 0.0
    %199 = vmatpush1.msra.mxu0 0.0
    %200 = vmatprep.subr.mxu0 0.0
    %201 = vmatpush1.msra.mxu0 0.0
    %202 = vmatprep.subr.mxu0 0.0
    %203 = vmatpush1.msra.mxu0 0.0
    %204 = vmatprep.subr.mxu0 0.0
    %205 = vmatpush1.msra.mxu0 0.0
    %206 = vmatprep.subr.mxu0 0.0
    %207 = vmatpush1.msra.mxu0 0.0
    %208 = vmatprep.subr.mxu0 0.0
    %209 = vmatpush1.msra.mxu0 0.0
    %210 = vmatprep.subr.mxu0 0.0
    %211 = vmatpush1.msra.mxu0 0.0
    %212 = vmatprep.subr.mxu0 0.0
    %213 = vmatpush1.msra.mxu0 0.0
    %214 = vmatprep.subr.mxu0 0.0
    %215 = vmatpush1.msra.mxu0 0.0
    %216 = vmatprep.subr.mxu0 0.0
    %217 = vmatpush1.msra.mxu0 0.0
    %218 = vmatprep.subr.mxu0 0.0
    %219 = vmatpush1.msra.mxu0 0.0
    %220 = vmatprep.subr.mxu0 0.0
    %221 = vmatpush1.msra.mxu0 0.0
    %222 = vmatprep.subr.mxu0 0.0
    %223 = vmatpush1.msra.mxu0 0.0
    %224 = vmatprep.subr.mxu0 0.0
    %225 = vmatpush1.msra.mxu0 0.0
    %226 = vmatprep.subr.mxu0 0.0
    %227 = vmatpush1.msra.mxu0 0.0
    %228 = vmatprep.subr.mxu0 0.0
    %229 = vmatpush1.msra.mxu0 0.0
    %230 = vmatprep.subr.mxu0 0.0
    %231 = vmatpush1.msra.mxu0 0.0
    %232 = vmatprep.subr.mxu0 0.0
    %233 = vmatpush1.msra.mxu0 0.0
    %234 = vmatprep.subr.mxu0 0.0
    %235 = vmatpush1.msra.mxu0 0.0
    %236 = vmatprep.subr.mxu0 0.0
    %237 = vmatpush1.msra.mxu0 0.0
    %238 = vmatprep.subr.mxu0 0.0
    %239 = vmatpush1.msra.mxu0 0.0
    %240 = vmatprep.subr.mxu0 0.0
    %241 = vmatpush1.msra.mxu0 0.0
    %242 = vmatprep.subr.mxu0 0.0
    %243 = vmatpush1.msra.mxu0 0.0
    %244 = vmatprep.subr.mxu0 0.0
    %245 = vmatpush1.msra.mxu0 0.0
    %246 = vmatprep.subr.mxu0 0.0
    %247 = vmatpush1.msra.mxu0 0.0
    %248 = vmatprep.subr.mxu0 0.0
    %249 = vmatpush1.msra.mxu0 0.0
    %250 = vmatprep.subr.mxu0 0.0
    %251 = vmatpush1.msra.mxu0 0.0
    %252 = vmatprep.subr.mxu0 0.0
    %253 = vmatpush1.msra.mxu0 0.0
    %254 = vmatprep.mubr.f32.mxu0 0.0
    %255 = vmatmul.mubr.f32.gmra.mrb[0].mxu0 %v185
    %v256 = vpop.f32.mrb[0].mxu0
    %v257 = vadd.f32 0.0, %v256
    %v258 = vpop.f32.mrb[0].mxu0
    %259 = vmatprep.mubr.f32.mxu0 0.0
    %260 = vmatmul.mubr.f32.gmra.mrb[0].mxu0 %v188
    %v261 = vpop.f32.mrb[0].mxu0
    %v262 = vadd.f32 0.0, %v261
    %v263 = vpop.f32.mrb[0].mxu0
    %264 = vdwg.mxu0
    %v266 = vsel %vm183, %v179, 0
    %v269 = vsel %vm183, %v180, 0
    %271 = vmatprep.subr.mxu0 0.0
    %272 = vmatpush1.msra.mxu0 %v104
    %273 = vmatprep.subr.mxu0 0.0
    %274 = vmatpush1.msra.mxu0 0.0
    %275 = vmatprep.subr.mxu0 0.0
    %276 = vmatpush1.msra.mxu0 0.0
    %277 = vmatprep.subr.mxu0 0.0
    %278 = vmatpush1.msra.mxu0 0.0
    %279 = vmatprep.subr.mxu0 0.0
    %280 = vmatpush1.msra.mxu0 0.0
    %281 = vmatprep.subr.mxu0 0.0
    %282 = vmatpush1.msra.mxu0 0.0
    %283 = vmatprep.subr.mxu0 0.0
    %284 = vmatpush1.msra.mxu0 0.0
    %285 = vmatprep.subr.mxu0 0.0
    %286 = vmatpush1.msra.mxu0 0.0
    %287 = vmatprep.subr.mxu0 0.0
    %288 = vmatpush1.msra.mxu0 0.0
    %289 = vmatprep.subr.mxu0 0.0
    %290 = vmatpush1.msra.mxu0 0.0
    %291 = vmatprep.subr.mxu0 0.0
    %292 = vmatpush1.msra.mxu0 0.0
    %293 = vmatprep.subr.mxu0 0.0
    %294 = vmatpush1.msra.mxu0 0.0
    %295 = vmatprep.subr.mxu0 0.0
    %296 = vmatpush1.msra.mxu0 0.0
    %297 = vmatprep.subr.mxu0 0.0
    %298 = vmatpush1.msra.mxu0 0.0
    %299 = vmatprep.subr.mxu0 0.0
    %300 = vmatpush1.msra.mxu0 0.0
    %301 = vmatprep.subr.mxu0 0.0
    %302 = vmatpush1.msra.mxu0 0.0
    %303 = vmatprep.subr.mxu0 0.0
    %304 = vmatpush1.msra.mxu0 0.0
    %305 = vmatprep.subr.mxu0 0.0
    %306 = vmatpush1.msra.mxu0 0.0
    %307 = vmatprep.subr.mxu0 0.0
    %308 = vmatpush1.msra.mxu0 0.0
    %309 = vmatprep.subr.mxu0 0.0
    %310 = vmatpush1.msra.mxu0 0.0
    %311 = vmatprep.subr.mxu0 0.0
    %312 = vmatpush1.msra.mxu0 0.0
    %313 = vmatprep.subr.mxu0 0.0
    %314 = vmatpush1.msra.mxu0 0.0
    %315 = vmatprep.subr.mxu0 0.0
    %316 = vmatpush1.msra.mxu0 0.0
    %317 = vmatprep.subr.mxu0 0.0
    %318 = vmatpush1.msra.mxu0 0.0
    %319 = vmatprep.subr.mxu0 0.0
    %320 = vmatpush1.msra.mxu0 0.0
    %321 = vmatprep.subr.mxu0 0.0
    %322 = vmatpush1.msra.mxu0 0.0
    %323 = vmatprep.subr.mxu0 0.0
    %324 = vmatpush1.msra.mxu0 0.0
    %325 = vmatprep.subr.mxu0 0.0
    %326 = vmatpush1.msra.mxu0 0.0
    %327 = vmatprep.subr.mxu0 0.0
    %328 = vmatpush1.msra.mxu0 0.0
    %329 = vmatprep.subr.mxu0 0.0
    %330 = vmatpush1.msra.mxu0 0.0
    %331 = vmatprep.subr.mxu0 0.0
    %332 = vmatpush1.msra.mxu0 0.0
    %333 = vmatprep.subr.mxu0 0.0
    %334 = vmatpush1.msra.mxu0 0.0
    %335 = vmatprep.mubr.f32.mxu0 0.0
    %336 = vmatmul.mubr.f32.gmra.mrb[0].mxu0 %v266
    %v337 = vpop.f32.mrb[0].mxu0
    %v338 = vadd.f32 %v257, %v337
    %v339 = vpop.f32.mrb[0].mxu0
    %340 = vmatprep.mubr.f32.mxu0 0.0
    %341 = vmatmul.mubr.f32.gmra.mrb[0].mxu0 %v269
    %v342 = vpop.f32.mrb[0].mxu0
    %v343 = vadd.f32 %v262, %v342
    %v344 = vpop.f32.mrb[0].mxu0
    %345 = vdwg.mxu0
    %v346 = vld [vmem:[%s3] sm:$0xff]
    %v347 = vld [vmem:[%s3 + $0x8] sm:$0xff]
    %349 = vset.pattern.permute.xlu0 0
    %350 = vperm.xlu0 %349, %v346
    %v351 = vpop.permute.xlu0 %350
    %354 = vset.pattern.permute.xlu0 0
    %355 = vperm.xlu0 %354, %v347
    %v356 = vpop.permute.xlu0 %355
    %v358 = vadd.f32 %v338, %v351
    %v359 = vadd.f32 %v343, %v356
    %v360 = vlaneseq
    %v361 = vand.u32 %v360, 127
    %vm362 = vcmp.lt.s32.totalorder %v361, 9
    %v363 = vsel %vm362, 1, 0
    %vm364 = vcmp.eq.s32.totalorder %v363, 1
    %v365 = vsel %vm364, %v358, 0.0
    %v366 = vsel %vm364, %v359, 0.0
    %367 = vadd.xlane.f32.xlu0 %v365
    %v368 = vpop.xlane.xlu0 %367
    %369 = vadd.xlane.f32.xlu0 %v366
    %v370 = vpop.xlane.xlu0 %369
    %v371 = vmul.f32 %v368, 0.11111111
    %v372 = vmul.f32 %v370, 0.11111111
    %v373 = vmul.f32 %v365, %v365
    %v374 = vmul.f32 %v366, %v366
    %375 = vadd.xlane.f32.xlu0 %v373
    %v376 = vpop.xlane.xlu0 %375
    %377 = vadd.xlane.f32.xlu0 %v374
    %v378 = vpop.xlane.xlu0 %377
    %v379 = vmul.f32 %v376, 0.11111111
    %v380 = vmul.f32 %v378, 0.11111111
    %v381 = vmul.f32 %v371, %v371
    %v382 = vmul.f32 %v372, %v372
    %v383 = vsub.f32 %v379, %v381
    %v384 = vsub.f32 %v380, %v382
    %v385 = vmax.f32 %v383, 0.0
    %v386 = vmax.f32 %v384, 0.0
    %v387 = vsub.f32 %v358, %v371
    %v388 = vsub.f32 %v359, %v372
    %v389 = vadd.f32 %v385, 1e-05
    %v390 = vadd.f32 %v386, 1e-05
    %v391 = vrsqrt.pop %v389
    %v392 = vrsqrt.pop %v390
    %v393 = vmul.f32 %v387, %v391
    %v394 = vmul.f32 %v388, %v392
    %v395 = vmul.f32 %v393, 0.5
    %v396 = vmul.f32 %v394, 0.5
    %v397 = vmul.f32 %v393, 0.70710677
    %v398 = vmul.f32 %v394, 0.70710677
    %v399 = verf.f32.pop %v397
    %v400 = verf.f32.pop %v398
    %v401 = vadd.f32 %v399, 1.0
    %v402 = vadd.f32 %v400, 1.0
    %v403 = vmul.f32 %v395, %v401
    %v404 = vmul.f32 %v396, %v402
    %v405 = vld [vmem:[%s6] sm:$0xff]
    %v406 = vld [vmem:[%s6 + $0x8] sm:$0xff]
    %v407 = vld [vmem:[%s6 + $0x10] sm:$0xff]
    %v408 = vld [vmem:[%s6 + $0x18] sm:$0xff]
    %v409 = vld [vmem:[%s6 + $0x20] sm:$0xff]
    %v410 = vld [vmem:[%s6 + $0x28] sm:$0xff]
    %v411 = vld [vmem:[%s6 + $0x30] sm:$0xff]
    %v412 = vld [vmem:[%s6 + $0x38] sm:$0xff]
    %v413 = vld [vmem:[%s6 + $0x40] sm:$0xff]
    %v414 = vld [vmem:[%s6 + $0x48] sm:$0xff]
    %v415 = vld [vmem:[%s6 + $0x50] sm:$0xff]
    %v416 = vld [vmem:[%s6 + $0x58] sm:$0xff]
    %v417 = vld [vmem:[%s6 + $0x60] sm:$0xff]
    %v418 = vld [vmem:[%s6 + $0x68] sm:$0xff]
    %v419 = vld [vmem:[%s6 + $0x70] sm:$0xff]
    %v420 = vld [vmem:[%s6 + $0x78] sm:$0xff]
    %v421 = vld [vmem:[%s7] sm:$0xff]
    %v422 = vld [vmem:[%s7 + $0x8] sm:$0xff]
    %v423 = vld [vmem:[%s7 + $0x10] sm:$0xff]
    %v424 = vld [vmem:[%s7 + $0x18] sm:$0xff]
    %v425 = vld [vmem:[%s7 + $0x20] sm:$0xff]
    %v426 = vld [vmem:[%s7 + $0x28] sm:$0xff]
    %v427 = vld [vmem:[%s7 + $0x30] sm:$0xff]
    %v428 = vld [vmem:[%s7 + $0x38] sm:$0xff]
    %v429 = vld [vmem:[%s7 + $0x40] sm:$0xff]
    %v430 = vld [vmem:[%s7 + $0x48] sm:$0xff]
    %v431 = vld [vmem:[%s7 + $0x50] sm:$0xff]
    %v432 = vld [vmem:[%s7 + $0x58] sm:$0xff]
    %v433 = vld [vmem:[%s7 + $0x60] sm:$0xff]
    %v434 = vld [vmem:[%s7 + $0x68] sm:$0xff]
    %v435 = vld [vmem:[%s7 + $0x70] sm:$0xff]
    %v436 = vld [vmem:[%s7 + $0x78] sm:$0xff]
    %437 = vmatprep.subr.mxu0 0.0
    %438 = vmatpush1.msra.mxu0 %v421
    %439 = vmatprep.subr.mxu0 0.0
    %440 = vmatpush1.msra.mxu0 %v422
    %441 = vmatprep.subr.mxu0 0.0
    %442 = vmatpush1.msra.mxu0 %v423
    %443 = vmatprep.subr.mxu0 0.0
    %444 = vmatpush1.msra.mxu0 %v424
    %445 = vmatprep.subr.mxu0 0.0
    %446 = vmatpush1.msra.mxu0 %v425
    %447 = vmatprep.subr.mxu0 0.0
    %448 = vmatpush1.msra.mxu0 %v426
    %449 = vmatprep.subr.mxu0 0.0
    %450 = vmatpush1.msra.mxu0 %v427
    %451 = vmatprep.subr.mxu0 0.0
    %452 = vmatpush1.msra.mxu0 %v428
    %453 = vmatprep.subr.mxu0 0.0
    %454 = vmatpush1.msra.mxu0 %v429
    %455 = vmatprep.subr.mxu0 0.0
    %456 = vmatpush1.msra.mxu0 %v430
    %457 = vmatprep.subr.mxu0 0.0
    %458 = vmatpush1.msra.mxu0 %v431
    %459 = vmatprep.subr.mxu0 0.0
    %460 = vmatpush1.msra.mxu0 %v432
    %461 = vmatprep.subr.mxu0 0.0
    %462 = vmatpush1.msra.mxu0 %v433
    %463 = vmatprep.subr.mxu0 0.0
    %464 = vmatpush1.msra.mxu0 %v434
    %465 = vmatprep.subr.mxu0 0.0
    %466 = vmatpush1.msra.mxu0 %v435
    %467 = vmatprep.subr.mxu0 0.0
    %468 = vmatpush1.msra.mxu0 %v436
    %469 = vmatprep.subr.mxu0 0.0
    %470 = vmatpush1.msra.mxu0 0.0
    %471 = vmatprep.subr.mxu0 0.0
    %472 = vmatpush1.msra.mxu0 0.0
    %473 = vmatprep.subr.mxu0 0.0
    %474 = vmatpush1.msra.mxu0 0.0
    %475 = vmatprep.subr.mxu0 0.0
    %476 = vmatpush1.msra.mxu0 0.0
    %477 = vmatprep.subr.mxu0 0.0
    %478 = vmatpush1.msra.mxu0 0.0
    %479 = vmatprep.subr.mxu0 0.0
    %480 = vmatpush1.msra.mxu0 0.0
    %481 = vmatprep.subr.mxu0 0.0
    %482 = vmatpush1.msra.mxu0 0.0
    %483 = vmatprep.subr.mxu0 0.0
    %484 = vmatpush1.msra.mxu0 0.0
    %485 = vmatprep.subr.mxu0 0.0
    %486 = vmatpush1.msra.mxu0 0.0
    %487 = vmatprep.subr.mxu0 0.0
    %488 = vmatpush1.msra.mxu0 0.0
    %489 = vmatprep.subr.mxu0 0.0
    %490 = vmatpush1.msra.mxu0 0.0
    %491 = vmatprep.subr.mxu0 0.0
    %492 = vmatpush1.msra.mxu0 0.0
    %493 = vmatprep.subr.mxu0 0.0
    %494 = vmatpush1.msra.mxu0 0.0
    %495 = vmatprep.subr.mxu0 0.0
    %496 = vmatpush1.msra.mxu0 0.0
    %497 = vmatprep.subr.mxu0 0.0
    %498 = vmatpush1.msra.mxu0 0.0
    %499 = vmatprep.subr.mxu0 0.0
    %500 = vmatpush1.msra.mxu0 0.0
    %501 = vmatprep.mubr.f32.mxu0 0.0
    %502 = vmatmul.mubr.f32.gmra.mrb[0].mxu0 %v404
    %v503 = vpop.f32.mrb[0].mxu0
    %v504 = vadd.f32 0.0, %v503
    %v505 = vpop.f32.mrb[0].mxu0
    %506 = vdwg.mxu0
    %507 = vmatprep.subr.mxu0 0.0
    %508 = vmatpush1.msra.mxu0 %v405
    %509 = vmatprep.subr.mxu0 0.0
    %510 = vmatpush1.msra.mxu0 %v406
    %511 = vmatprep.subr.mxu0 0.0
    %512 = vmatpush1.msra.mxu0 %v407
    %513 = vmatprep.subr.mxu0 0.0
    %514 = vmatpush1.msra.mxu0 %v408
    %515 = vmatprep.subr.mxu0 0.0
    %516 = vmatpush1.msra.mxu0 %v409
    %517 = vmatprep.subr.mxu0 0.0
    %518 = vmatpush1.msra.mxu0 %v410
    %519 = vmatprep.subr.mxu0 0.0
    %520 = vmatpush1.msra.mxu0 %v411
    %521 = vmatprep.subr.mxu0 0.0
    %522 = vmatpush1.msra.mxu0 %v412
    %523 = vmatprep.subr.mxu0 0.0
    %524 = vmatpush1.msra.mxu0 %v413
    %525 = vmatprep.subr.mxu0 0.0
    %526 = vmatpush1.msra.mxu0 %v414
    %527 = vmatprep.subr.mxu0 0.0
    %528 = vmatpush1.msra.mxu0 %v415
    %529 = vmatprep.subr.mxu0 0.0
    %530 = vmatpush1.msra.mxu0 %v416
    %531 = vmatprep.subr.mxu0 0.0
    %532 = vmatpush1.msra.mxu0 %v417
    %533 = vmatprep.subr.mxu0 0.0
    %534 = vmatpush1.msra.mxu0 %v418
    %535 = vmatprep.subr.mxu0 0.0
    %536 = vmatpush1.msra.mxu0 %v419
    %537 = vmatprep.subr.mxu0 0.0
    %538 = vmatpush1.msra.mxu0 %v420
    %539 = vmatprep.subr.mxu0 0.0
    %540 = vmatpush1.msra.mxu0 0.0
    %541 = vmatprep.subr.mxu0 0.0
    %542 = vmatpush1.msra.mxu0 0.0
    %543 = vmatprep.subr.mxu0 0.0
    %544 = vmatpush1.msra.mxu0 0.0
    %545 = vmatprep.subr.mxu0 0.0
    %546 = vmatpush1.msra.mxu0 0.0
    %547 = vmatprep.subr.mxu0 0.0
    %548 = vmatpush1.msra.mxu0 0.0
    %549 = vmatprep.subr.mxu0 0.0
    %550 = vmatpush1.msra.mxu0 0.0
    %551 = vmatprep.subr.mxu0 0.0
    %552 = vmatpush1.msra.mxu0 0.0
    %553 = vmatprep.subr.mxu0 0.0
    %554 = vmatpush1.msra.mxu0 0.0
    %555 = vmatprep.subr.mxu0 0.0
    %556 = vmatpush1.msra.mxu0 0.0
    %557 = vmatprep.subr.mxu0 0.0
    %558 = vmatpush1.msra.mxu0 0.0
    %559 = vmatprep.subr.mxu0 0.0
    %560 = vmatpush1.msra.mxu0 0.0
    %561 = vmatprep.subr.mxu0 0.0
    %562 = vmatpush1.msra.mxu0 0.0
    %563 = vmatprep.subr.mxu0 0.0
    %564 = vmatpush1.msra.mxu0 0.0
    %565 = vmatprep.subr.mxu0 0.0
    %566 = vmatpush1.msra.mxu0 0.0
    %567 = vmatprep.subr.mxu0 0.0
    %568 = vmatpush1.msra.mxu0 0.0
    %569 = vmatprep.subr.mxu0 0.0
    %570 = vmatpush1.msra.mxu0 0.0
    %571 = vmatprep.mubr.f32.mxu0 0.0
    %572 = vmatmul.mubr.f32.gmra.mrb[0].mxu0 %v403
    %v573 = vpop.f32.mrb[0].mxu0
    %v574 = vadd.f32 %v504, %v573
    %v575 = vpop.f32.mrb[0].mxu0
    %576 = vdwg.mxu0
    %577 = vst.msk [vmem:[#allocation2] sm:$0xff] %vm33, %v574
    // Predicated region
    $region34: #{tpu_custom_call.1} parent=1 // pred_check
      _
    $region35: #{tpu_custom_call.1} parent=1 // pred_check_branch
      %579 = sbr.rel (0) target = $region37
    $region36: #{tpu_custom_call.1} parent=1 // pred_region
      %s581 = ssub.s32 128, 128
      %582 = vsyncadd [#allocation3], %s581
      %s584 = sshll.u32 [#allocation2], 4
      %s585 = int_to_ptr.vmem [resolvable:$true] %s584
      %587 = dma.vmem_to_hbm [thread:$0]  %s585, 128, %s8, [#allocation3]
    $region37: #{tpu_custom_call.1} parent=1 // pred_fallthru
      _
    // Predicated region
    $region38: #{tpu_custom_call.1} parent=1 // pred_check
      _
    $region39: #{tpu_custom_call.1} parent=1 // pred_check_branch
      %589 = sbr.rel (0) target = $region41
    $region40: #{tpu_custom_call.1} parent=1 // pred_region
      %590 = dma.done [#allocation3], 128
    $region41: #{tpu_custom_call.1} parent=1 // pred_fallthru
      _
    %591 = vsyncpa [#allocation3], 1

</llo_original>
